<compile_context>
chip_gen: v5e
topology: v5e:2x2
jax: 0.10.0
libtpu: 0.0.40
codegen_flags: <defaults>
</compile_context>

<pallas_src>
import functools

import jax
import jax.numpy as jnp
from jax.experimental import pallas as pl
from jax.experimental.pallas import tpu as pltpu

_NEG_BIG = -1e30   # finite "minus infinity" for padded logit rows (avoids NaN)


def _round_up(x: int, m: int) -> int:
    return ((x + m - 1) // m) * m


def _mlp_policy_kernel(x_ref, w1_ref, b1_ref, w2_ref, b2_ref, w3_ref, b3_ref,
                       act_ref, out_ref, *, num_actions: int):
    """One batch tile (feature-major): 3-layer MLP -> logits + Categorical logp.

    x_ref   : (D_pad, TB) obs tile, batch on lanes, MXU-operand dtype.
    w*_ref  : transposed weights (out_features, in_features), VMEM-resident.
    b*_ref  : (out_features, 1) float32 biases; b3 pad rows are -1e30.
    act_ref : (nb, 1, tb) int32, whole array VMEM-resident.
    out_ref : (A_rows, TB) float32 slab:
                rows [0, num_actions)  -> logits
                row  num_actions       -> log_prob(act)
                remaining rows         -> padding (discarded by the wrapper)
    """
    i = pl.program_id(0)
    f32 = jnp.float32
    wdt = w1_ref.dtype                                   # MXU operand dtype

    x = x_ref[...]                                       # (D_pad, TB)

    # Linear -> Tanh  (MXU matmul, f32 accumulation; tanh in f32 on VPU/EUP).
    h1 = jnp.tanh(jnp.dot(w1_ref[...], x,
                          preferred_element_type=f32) + b1_ref[...])
    h2 = jnp.tanh(jnp.dot(w2_ref[...], h1.astype(wdt),
                          preferred_element_type=f32) + b2_ref[...])
    # Output Linear (identity activation).  Padded rows get bias = -1e30.
    logits = (jnp.dot(w3_ref[...], h2.astype(wdt),
                      preferred_element_type=f32) + b3_ref[...])   # (A_rows, TB)

    # Categorical.log_prob(act) = logits[act, col] - logsumexp(logits[:, col]).
    # Padded rows contribute exp(-1e30 - m) == 0, so lse is exact.
    m = jnp.max(logits, axis=0, keepdims=True)                      # (1, TB)
    lse = m + jnp.log(jnp.sum(jnp.exp(logits - m), axis=0, keepdims=True))

    row = jax.lax.broadcasted_iota(jnp.int32, logits.shape, 0)
    act = act_ref[i]                                                # (1, TB) int32
    selected = jnp.sum(jnp.where(row == act, logits, 0.0),
                       axis=0, keepdims=True)
    logp = selected - lse                                           # (1, TB)

    # Pack logp into row `num_actions`; one unmasked, full-lane store.
    out_ref[...] = jnp.where(row == num_actions, logp, logits)


def mlp_categorical_policy_forward(obs, params, act=None, *,
                                   block_b: int = 4096,
                                   weight_dtype=jnp.bfloat16,
                                   vmem_budget_bytes: int = 16 * 1024 * 1024,
                                   core_parallel_batch: bool = False,
                                   return_packed: bool = False):
    """Forward pass of MLPCategoricalPolicy as one Pallas kernel.

    obs:    (B, input_dim) float32 observations.
    params: dict with w{1,2,3} as (in, out) and b{1,2,3} as (1, out) float32.
    act:    optional (B,) int actions, must lie in [0, num_actions).
            # NOTE: out-of-range actions silently give logp = -logsumexp.
    Returns (logits (B, A) float32, log_prob_a (B,) float32 or None), or the
    packed (A_rows, b_pad) slab if return_packed=True (rows [0,A)=logits,
    row A=logp, columns [0,B) valid).
    """
    obs = jnp.asarray(obs, jnp.float32)
    B, D = obs.shape
    H1 = params["w1"].shape[1]
    H2 = params["w2"].shape[1]
    A = params["w3"].shape[1]

    D_pad = _round_up(D, 8)
    A_rows = _round_up(A + 1, 8)      # logit rows [0,A) + logp row A (+ pad)

    # ---- batch tile sizing: big tiles, clamped to a conservative VMEM budget
    # (double-buffered obs/out tiles + resident weights + resident act must
    # stay well under v7x's 32 MiB scoped default).
    obs_itemsize = jnp.dtype(weight_dtype).itemsize
    resident_w_bytes = 2 * 4 * (H1 * D_pad + H1 + H2 * H1 + H2
                                + A_rows * H2 + A_rows)
    act_res_bytes = 2 * 4 * _round_up(B, 128)
    per_col_bytes = 2 * D_pad * obs_itemsize + 2 * A_rows * 4
    avail = max(vmem_budget_bytes - resident_w_bytes - act_res_bytes,
                128 * per_col_bytes)
    tb_cap = max(128, (avail // per_col_bytes) // 128 * 128)
    blk = max(128, (min(block_b, tb_cap) // 128) * 128)

    nb = pl.cdiv(B, blk)
    if core_parallel_batch:
        nb = max(2, nb + (nb % 2))           # keep both v7x TCs equally loaded
    tb = _round_up(pl.cdiv(B, nb), 128)      # lane-axis tile, minimal padding
    b_pad = tb * nb

    # ---- feature-major obs: cast to the MXU operand dtype, transpose, pad.
    obs_t = obs.astype(weight_dtype).T                       # (D, B)
    obs_t = jnp.pad(obs_t, ((0, D_pad - D), (0, b_pad - B)))

    have_act = act is not None
    act_arr = (jnp.asarray(act, jnp.int32) if have_act
               else jnp.zeros((B,), jnp.int32))
    act_p = jnp.pad(act_arr, (0, b_pad - B)).reshape(nb, 1, tb)

    # ---- transposed weights/biases; biases stay f32 (added post-MXU).
    f32 = jnp.float32
    w1t = jnp.pad(params["w1"].T.astype(f32),
                  ((0, 0), (0, D_pad - D))).astype(weight_dtype)     # (H1, D_pad)
    b1t = params["b1"].reshape(-1, 1).astype(f32)                    # (H1, 1)
    w2t = params["w2"].T.astype(weight_dtype)                        # (H2, H1)
    b2t = params["b2"].reshape(-1, 1).astype(f32)                    # (H2, 1)
    w3t = jnp.pad(params["w3"].T.astype(f32),
                  ((0, A_rows - A), (0, 0))).astype(weight_dtype)    # (A_rows, H2)
    b3t = jnp.pad(params["b3"].reshape(-1, 1).astype(f32),
                  ((0, A_rows - A), (0, 0)),
                  constant_values=_NEG_BIG)                          # (A_rows, 1)

    def resident(arr):
        # Constant block index -> fetched once, stays VMEM-resident.
        # (If hidden sizes grow large, add pipeline_mode=pl.Buffered(1) here
        #  to drop the duplicate double-buffer copy; negligible at these dims.)
        n = arr.ndim
        return pl.BlockSpec(arr.shape, lambda i, _n=n: (0,) * _n)

    grid_sem = ((pltpu.CORE_PARALLEL,) if core_parallel_batch
                else ("parallel",))

    slab = pl.pallas_call(
        functools.partial(_mlp_policy_kernel, num_actions=A),
        out_shape=jax.ShapeDtypeStruct((A_rows, b_pad), jnp.float32),
        grid=(nb,),
        in_specs=[
            pl.BlockSpec((D_pad, tb), lambda i: (0, i)),   # obs tile
            resident(w1t), resident(b1t),
            resident(w2t), resident(b2t),
            resident(w3t), resident(b3t),
            resident(act_p),                               # act, VMEM-resident
        ],
        out_specs=pl.BlockSpec((A_rows, tb), lambda i: (0, i)),
        compiler_params=pltpu.CompilerParams(dimension_semantics=grid_sem),
    )(obs_t, w1t, b1t, w2t, b2t, w3t, b3t, act_p)

    if return_packed:
        return slab

    logits = slab[:A, :B].T                       # (B, A)
    logp = slab[A, :B] if have_act else None      # (B,)
    return logits, logp


def init_mlp_params(key, sizes):
    """Deterministic PyTorch-Linear-style init: U(-1/sqrt(fan_in), 1/sqrt(fan_in))."""
    params = {}
    for li, (fan_in, fan_out) in enumerate(zip(sizes[:-1], sizes[1:]), start=1):
        key, kw, kb = jax.random.split(key, 3)
        bound = 1.0 / jnp.sqrt(jnp.float32(fan_in))
        params[f"w{li}"] = jax.random.uniform(
            kw, (fan_in, fan_out), jnp.float32, -bound, bound)
        params[f"b{li}"] = jax.random.uniform(
            kb, (1, fan_out), jnp.float32, -bound, bound)
    return params


def _reference_forward(obs, params, act, weight_dtype):
    """Pure-JAX reference with the same operand-precision policy as the kernel."""
    h = obs
    for li in (1, 2):
        w = params[f"w{li}"].astype(weight_dtype)
        h = jnp.tanh(jnp.dot(h.astype(weight_dtype), w,
                             preferred_element_type=jnp.float32)
                     + params[f"b{li}"])
    w3 = params["w3"].astype(weight_dtype)
    logits = (jnp.dot(h.astype(weight_dtype), w3,
                      preferred_element_type=jnp.float32) + params["b3"])
    logp = jax.nn.log_softmax(logits, axis=-1)[jnp.arange(obs.shape[0]), act]
    return logits, logp


if __name__ == "__main__":
    # Small shapes consistent with the module:
    #   input_dim=16, hidden_sizes=[32, 32], output_dim=8 (num actions), batch=8
    input_dim, hidden_sizes, output_dim, batch = 16, [32, 32], 8, 8
    sizes = [input_dim] + hidden_sizes + [output_dim]

    key = jax.random.PRNGKey(0)
    key, k_obs, k_act, k_params = jax.random.split(key, 4)

    obs = jax.random.normal(k_obs, (batch, input_dim), jnp.float32)
    act = jax.random.randint(k_act, (batch,), 0, output_dim, jnp.int32)
    params = init_mlp_params(k_params, sizes)

    # Default path: bf16 MXU operands (v5e/v6e/v7x all take bf16 with f32 acc);
    # tanh / exp / log / accumulation stay float32.
    logits_bf, logp_bf = mlp_categorical_policy_forward(obs, params, act)
    jax.block_until_ready((logits_bf, logp_bf))
    ref_logits_bf, ref_logp_bf = _reference_forward(obs, params, act, jnp.bfloat16)
    assert jnp.allclose(logits_bf, ref_logits_bf, atol=1e-2, rtol=1e-2)
    assert jnp.allclose(logp_bf, ref_logp_bf, atol=1e-2, rtol=1e-2)

    # Full-precision path, tight check against pure JAX.
    logits, logp_a = mlp_categorical_policy_forward(
        obs, params, act, weight_dtype=jnp.float32)
    jax.block_until_ready((logits, logp_a))
    ref_logits, ref_logp = _reference_forward(obs, params, act, jnp.float32)
    assert jnp.allclose(logits, ref_logits, atol=1e-5, rtol=1e-5)
    assert jnp.allclose(logp_a, ref_logp, atol=1e-5, rtol=1e-5)

    # act=None path (distribution only, like forward(obs) with no action).
    logits_only, logp_none = mlp_categorical_policy_forward(obs, params, None)
    jax.block_until_ready(logits_only)
    assert logp_none is None
    assert jnp.allclose(logits_only, ref_logits_bf, atol=1e-2, rtol=1e-2)

    print("KERNEL_OK")
</pallas_src>

<mosaic_0001>
module attributes {stable_mosaic.version = 11 : i64} {
  func.func @_mlp_policy_kernel(%arg0: i32, %arg1: memref<16x128xbf16, #tpu.memory_space<vmem>>, %arg2: memref<32x16xbf16, #tpu.memory_space<vmem>>, %arg3: memref<32x1xf32, #tpu.memory_space<vmem>>, %arg4: memref<32x32xbf16, #tpu.memory_space<vmem>>, %arg5: memref<32x1xf32, #tpu.memory_space<vmem>>, %arg6: memref<16x32xbf16, #tpu.memory_space<vmem>>, %arg7: memref<16x1xf32, #tpu.memory_space<vmem>>, %arg8: memref<1x1x128xi32, #tpu.memory_space<vmem>>, %arg9: memref<16x128xf32, #tpu.memory_space<vmem>>) attributes {dimension_semantics = [#tpu.dimension_semantics<parallel>], iteration_bounds = array<i64: 1>, scalar_prefetch = 0 : i64, scratch_operands = 0 : i64, tpu.core_type = #tpu.core_type<tc>, window_params = [{transform_indices = @transform_0, window_bounds = array<i64: 16, 128>}, {pipeline_mode = #tpu.pipeline_mode<synchronous>, transform_indices = @transform_1, window_bounds = array<i64: 32, 16>}, {pipeline_mode = #tpu.pipeline_mode<synchronous>, transform_indices = @transform_2, window_bounds = array<i64: 32, 1>}, {pipeline_mode = #tpu.pipeline_mode<synchronous>, transform_indices = @transform_3, window_bounds = array<i64: 32, 32>}, {pipeline_mode = #tpu.pipeline_mode<synchronous>, transform_indices = @transform_4, window_bounds = array<i64: 32, 1>}, {pipeline_mode = #tpu.pipeline_mode<synchronous>, transform_indices = @transform_5, window_bounds = array<i64: 16, 32>}, {pipeline_mode = #tpu.pipeline_mode<synchronous>, transform_indices = @transform_6, window_bounds = array<i64: 16, 1>}, {pipeline_mode = #tpu.pipeline_mode<synchronous>, transform_indices = @transform_7, window_bounds = array<i64: 1, 1, 128>}, {transform_indices = @transform_8, window_bounds = array<i64: 16, 128>}]} {
    %c0 = arith.constant 0 : index
    %c0_0 = arith.constant 0 : index
    %0 = vector.load %arg1[%c0, %c0_0] : memref<16x128xbf16, #tpu.memory_space<vmem>>, vector<16x128xbf16>
    %c0_1 = arith.constant 0 : index
    %c0_2 = arith.constant 0 : index
    %1 = vector.load %arg2[%c0_1, %c0_2] : memref<32x16xbf16, #tpu.memory_space<vmem>>, vector<32x16xbf16>
    %cst = arith.constant dense<0.000000e+00> : vector<32x128xf32>
    %2 = tpu.matmul %1, %0, %cst {dimension_numbers = #tpu.dot_dimension_numbers<[1], [0], [0], [1], [0, 0, 1, 1], [], []>} : vector<32x16xbf16>, vector<16x128xbf16>, vector<32x128xf32> -> vector<32x128xf32>
    %c0_3 = arith.constant 0 : index
    %c0_4 = arith.constant 0 : index
    %3 = vector.load %arg3[%c0_3, %c0_4] : memref<32x1xf32, #tpu.memory_space<vmem>>, vector<32x1xf32>
    %4 = vector.broadcast %3 : vector<32x1xf32> to vector<32x128xf32>
    %5 = arith.addf %2, %4 : vector<32x128xf32>
    %6 = math.tanh %5 : vector<32x128xf32>
    %c0_5 = arith.constant 0 : index
    %c0_6 = arith.constant 0 : index
    %7 = vector.load %arg4[%c0_5, %c0_6] : memref<32x32xbf16, #tpu.memory_space<vmem>>, vector<32x32xbf16>
    %8 = arith.truncf %6 : vector<32x128xf32> to vector<32x128xbf16>
    %cst_7 = arith.constant dense<0.000000e+00> : vector<32x128xf32>
    %9 = tpu.matmul %7, %8, %cst_7 {dimension_numbers = #tpu.dot_dimension_numbers<[1], [0], [0], [1], [0, 0, 1, 1], [], []>} : vector<32x32xbf16>, vector<32x128xbf16>, vector<32x128xf32> -> vector<32x128xf32>
    %c0_8 = arith.constant 0 : index
    %c0_9 = arith.constant 0 : index
    %10 = vector.load %arg5[%c0_8, %c0_9] : memref<32x1xf32, #tpu.memory_space<vmem>>, vector<32x1xf32>
    %11 = vector.broadcast %10 : vector<32x1xf32> to vector<32x128xf32>
    %12 = arith.addf %9, %11 : vector<32x128xf32>
    %13 = math.tanh %12 : vector<32x128xf32>
    %c0_10 = arith.constant 0 : index
    %c0_11 = arith.constant 0 : index
    %14 = vector.load %arg6[%c0_10, %c0_11] : memref<16x32xbf16, #tpu.memory_space<vmem>>, vector<16x32xbf16>
    %15 = arith.truncf %13 : vector<32x128xf32> to vector<32x128xbf16>
    %cst_12 = arith.constant dense<0.000000e+00> : vector<16x128xf32>
    %16 = tpu.matmul %14, %15, %cst_12 {dimension_numbers = #tpu.dot_dimension_numbers<[1], [0], [0], [1], [0, 0, 1, 1], [], []>} : vector<16x32xbf16>, vector<32x128xbf16>, vector<16x128xf32> -> vector<16x128xf32>
    %c0_13 = arith.constant 0 : index
    %c0_14 = arith.constant 0 : index
    %17 = vector.load %arg7[%c0_13, %c0_14] : memref<16x1xf32, #tpu.memory_space<vmem>>, vector<16x1xf32>
    %18 = vector.broadcast %17 : vector<16x1xf32> to vector<16x128xf32>
    %19 = arith.addf %16, %18 : vector<16x128xf32>
    %cst_15 = arith.constant dense<0xFF800000> : vector<128xf32>
    %20 = vector.multi_reduction <maximumf>, %19, %cst_15 [0] : vector<16x128xf32> to vector<128xf32>
    %21 = vector.shape_cast %20 : vector<128xf32> to vector<1x128xf32>
    %22 = vector.broadcast %21 : vector<1x128xf32> to vector<16x128xf32>
    %23 = arith.subf %19, %22 : vector<16x128xf32>
    %24 = math.exp %23 : vector<16x128xf32>
    %cst_16 = arith.constant dense<0.000000e+00> : vector<128xf32>
    %25 = vector.multi_reduction <add>, %24, %cst_16 [0] : vector<16x128xf32> to vector<128xf32>
    %26 = vector.shape_cast %25 : vector<128xf32> to vector<1x128xf32>
    %27 = math.log %26 : vector<1x128xf32>
    %28 = arith.addf %21, %27 : vector<1x128xf32>
    %29 = tpu.iota {dimensions = array<i32: 0>} : vector<16x128xi32>
    %30 = arith.index_cast %arg0 : i32 to index
    %c0_17 = arith.constant 0 : index
    %c0_18 = arith.constant 0 : index
    %31 = vector.load %arg8[%30, %c0_17, %c0_18] : memref<1x1x128xi32, #tpu.memory_space<vmem>>, vector<1x1x128xi32>
    %32 = vector.shape_cast %31 : vector<1x1x128xi32> to vector<1x128xi32>
    %33 = vector.broadcast %32 : vector<1x128xi32> to vector<16x128xi32>
    %34 = arith.cmpi eq, %29, %33 : vector<16x128xi32>
    %cst_19 = arith.constant 0.000000e+00 : f32
    %35 = vector.broadcast %cst_19 : f32 to vector<16x128xf32>
    %36 = arith.select %34, %19, %35 : vector<16x128xi1>, vector<16x128xf32>
    %cst_20 = arith.constant dense<0.000000e+00> : vector<128xf32>
    %37 = vector.multi_reduction <add>, %36, %cst_20 [0] : vector<16x128xf32> to vector<128xf32>
    %38 = vector.shape_cast %37 : vector<128xf32> to vector<1x128xf32>
    %39 = arith.subf %38, %28 : vector<1x128xf32>
    %c8_i32 = arith.constant 8 : i32
    %40 = vector.broadcast %c8_i32 : i32 to vector<16x128xi32>
    %41 = arith.cmpi eq, %29, %40 : vector<16x128xi32>
    %42 = vector.shape_cast %39 : vector<1x128xf32> to vector<1x128xf32>
    %43 = vector.broadcast %42 : vector<1x128xf32> to vector<16x128xf32>
    %44 = arith.select %41, %43, %19 : vector<16x128xi1>, vector<16x128xf32>
    %c0_21 = arith.constant 0 : index
    %c0_22 = arith.constant 0 : index
    %45 = vector.load %arg9[%c0_21, %c0_22] : memref<16x128xf32, #tpu.memory_space<vmem>>, vector<16x128xf32>
    tpu.vector_store %arg9[%c0_21, %c0_22], %44 {strides = array<i32>} : memref<16x128xf32, #tpu.memory_space<vmem>>, vector<16x128xf32>,
    return
  }
  func.func @transform_0(%arg0: i32) -> (i32, i32) {
    %c0_i32 = arith.constant 0 : i32
    %c0_i32_0 = arith.constant 0 : i32
    return %c0_i32, %arg0 : i32, i32
  }
  func.func @transform_1(%arg0: i32) -> (i32, i32) {
    %c0_i32 = arith.constant 0 : i32
    %c0_i32_0 = arith.constant 0 : i32
    %c0_i32_1 = arith.constant 0 : i32
    return %c0_i32, %c0_i32_0 : i32, i32
  }
  func.func @transform_2(%arg0: i32) -> (i32, i32) {
    %c0_i32 = arith.constant 0 : i32
    %c0_i32_0 = arith.constant 0 : i32
    %c0_i32_1 = arith.constant 0 : i32
    return %c0_i32, %c0_i32_0 : i32, i32
  }
  func.func @transform_3(%arg0: i32) -> (i32, i32) {
    %c0_i32 = arith.constant 0 : i32
    %c0_i32_0 = arith.constant 0 : i32
    %c0_i32_1 = arith.constant 0 : i32
    return %c0_i32, %c0_i32_0 : i32, i32
  }
  func.func @transform_4(%arg0: i32) -> (i32, i32) {
    %c0_i32 = arith.constant 0 : i32
    %c0_i32_0 = arith.constant 0 : i32
    %c0_i32_1 = arith.constant 0 : i32
    return %c0_i32, %c0_i32_0 : i32, i32
  }
  func.func @transform_5(%arg0: i32) -> (i32, i32) {
    %c0_i32 = arith.constant 0 : i32
    %c0_i32_0 = arith.constant 0 : i32
    %c0_i32_1 = arith.constant 0 : i32
    return %c0_i32, %c0_i32_0 : i32, i32
  }
  func.func @transform_6(%arg0: i32) -> (i32, i32) {
    %c0_i32 = arith.constant 0 : i32
    %c0_i32_0 = arith.constant 0 : i32
    %c0_i32_1 = arith.constant 0 : i32
    return %c0_i32, %c0_i32_0 : i32, i32
  }
  func.func @transform_7(%arg0: i32) -> (i32, i32, i32) {
    %c0_i32 = arith.constant 0 : i32
    %c0_i32_0 = arith.constant 0 : i32
    %c0_i32_1 = arith.constant 0 : i32
    %c0_i32_2 = arith.constant 0 : i32
    return %c0_i32, %c0_i32_0, %c0_i32_1 : i32, i32, i32
  }
  func.func @transform_8(%arg0: i32) -> (i32, i32) {
    %c0_i32 = arith.constant 0 : i32
    %c0_i32_0 = arith.constant 0 : i32
    return %c0_i32, %arg0 : i32, i32
  }
}

</mosaic_0001>

<llo_original>
// kernel: tpu_custom_call.1
$region0: #{tpu_custom_call.1}
  #allocation0 [shape = 'u32[]', space=smem, size = 0x4, offset = 0x4, fixed_abs, tag = 'smem constant byte address 0x4 - core index']
  #allocation1 [shape = 'u32[72,128]{1,0:T(1,128)}', space=vmem, size = 0x9000, scoped, tag = 'internal scratch']
  %s0 = inlined_call_operand.vmem [shape: bf16[16,128], index: 0, kind: input, shape index: {}]
  %s1 = inlined_call_operand.vmem [shape: bf16[32,16], index: 1, kind: input, shape index: {}]
  %s2 = inlined_call_operand.vmem [shape: f32[32,1], index: 2, kind: input, shape index: {}]
  %s3 = inlined_call_operand.vmem [shape: bf16[32,32], index: 3, kind: input, shape index: {}]
  %s4 = inlined_call_operand.vmem [shape: f32[32,1], index: 4, kind: input, shape index: {}]
  %s5 = inlined_call_operand.vmem [shape: bf16[16,32], index: 5, kind: input, shape index: {}]
  %s6 = inlined_call_operand.vmem [shape: f32[16,1], index: 6, kind: input, shape index: {}]
  %s7 = inlined_call_operand.vmem [shape: s32[1,1,128], index: 7, kind: input, shape index: {}]
  %s8 = inlined_call_operand.hbm [shape: f32[16,128], index: 8, kind: output, shape index: {}]
  %s9 = sld [smem:[#allocation0]]
  $region42: #{tpu_custom_call.1} parent=0
    _
  %s11 = ssub.s32 1, %s9
  %s12 = scalar_select 0, %s11, %s9
  $region1: #{tpu_custom_call.1} parent=0
    #allocation2 [shape = 'u8[8192]{0}', space=vmem, size = 0x2000, scoped, tag = 'output window, operand 0, single buffered']
    #allocation3 [shape = 's32[1]{0}', space=sflag, size = 0x4, scoped, tag = 'scoped memory for tpu_custom_call.1']
    %13 = vsyncpa [#allocation3], 0
    // Predicated region
    $region2: #{tpu_custom_call.1} parent=1 // pred_check
      _
    $region3: #{tpu_custom_call.1} parent=1 // pred_check_branch
      %15 = sbr.rel (0) target = $region5
    $region4: #{tpu_custom_call.1} parent=1 // pred_region
      _
    $region5: #{tpu_custom_call.1} parent=1 // pred_fallthru
      _
    // Predicated region
    $region6: #{tpu_custom_call.1} parent=1 // pred_check
      _
    $region7: #{tpu_custom_call.1} parent=1 // pred_check_branch
      %17 = sbr.rel (0) target = $region9
    $region8: #{tpu_custom_call.1} parent=1 // pred_region
      _
    $region9: #{tpu_custom_call.1} parent=1 // pred_fallthru
      _
    // Predicated region
    $region10: #{tpu_custom_call.1} parent=1 // pred_check
      _
    $region11: #{tpu_custom_call.1} parent=1 // pred_check_branch
      %19 = sbr.rel (0) target = $region13
    $region12: #{tpu_custom_call.1} parent=1 // pred_region
      _
    $region13: #{tpu_custom_call.1} parent=1 // pred_fallthru
      _
    // Predicated region
    $region14: #{tpu_custom_call.1} parent=1 // pred_check
      _
    $region15: #{tpu_custom_call.1} parent=1 // pred_check_branch
      %21 = sbr.rel (0) target = $region17
    $region16: #{tpu_custom_call.1} parent=1 // pred_region
      _
    $region17: #{tpu_custom_call.1} parent=1 // pred_fallthru
      _
    // Predicated region
    $region18: #{tpu_custom_call.1} parent=1 // pred_check
      _
    $region19: #{tpu_custom_call.1} parent=1 // pred_check_branch
      %23 = sbr.rel (0) target = $region21
    $region20: #{tpu_custom_call.1} parent=1 // pred_region
      _
    $region21: #{tpu_custom_call.1} parent=1 // pred_fallthru
      _
    // Predicated region
    $region22: #{tpu_custom_call.1} parent=1 // pred_check
      _
    $region23: #{tpu_custom_call.1} parent=1 // pred_check_branch
      %25 = sbr.rel (0) target = $region25
    $region24: #{tpu_custom_call.1} parent=1 // pred_region
      _
    $region25: #{tpu_custom_call.1} parent=1 // pred_fallthru
      _
    // Predicated region
    $region26: #{tpu_custom_call.1} parent=1 // pred_check
      _
    $region27: #{tpu_custom_call.1} parent=1 // pred_check_branch
      %27 = sbr.rel (0) target = $region29
    $region28: #{tpu_custom_call.1} parent=1 // pred_region
      _
    $region29: #{tpu_custom_call.1} parent=1 // pred_fallthru
      _
    // Predicated region
    $region30: #{tpu_custom_call.1} parent=1 // pred_check
      _
    $region31: #{tpu_custom_call.1} parent=1 // pred_check_branch
      %29 = sbr.rel (0) target = $region33
    $region32: #{tpu_custom_call.1} parent=1 // pred_region
      _
    $region33: #{tpu_custom_call.1} parent=1 // pred_fallthru
      _
    %v31 = vld [vmem:[%s0] sm:$0xf]
    %v32 = vld [vmem:[%s0 + $0x4] sm:$0xf]
    %v33 = vld [vmem:[%s1] sm:$0xf]
    %v34 = vld [vmem:[%s1 + $0x4] sm:$0xf]
    %v35 = vld [vmem:[%s1 + $0x8] sm:$0xf]
    %v36 = vld [vmem:[%s1 + $0xc] sm:$0xf]
    %v37 = vld [vmem:[%s2] sm:$0xff]
    %v38 = vld [vmem:[%s2 + $0x8] sm:$0xff]
    %v39 = vld [vmem:[%s2 + $0x10] sm:$0xff]
    %v40 = vld [vmem:[%s2 + $0x18] sm:$0xff]
    %42 = vset.pattern.permute.xlu0 0
    %43 = vperm.xlu0 %42, %v37
    %v44 = vpop.permute.xlu0 %43
    %47 = vset.pattern.permute.xlu0 0
    %48 = vperm.xlu0 %47, %v38
    %v49 = vpop.permute.xlu0 %48
    %52 = vset.pattern.permute.xlu0 0
    %53 = vperm.xlu0 %52, %v39
    %v54 = vpop.permute.xlu0 %53
    %57 = vset.pattern.permute.xlu0 0
    %58 = vperm.xlu0 %57, %v40
    %v59 = vpop.permute.xlu0 %58
    %v65 = vunpack.c.l.b16 %v33
    %v66 = vunpack.c.l.b16 %v34
    %v67 = vunpack.c.l.b16 %v35
    %v68 = vunpack.c.l.b16 %v36
    %v69 = vpack.c.b16 %v66, %v65
    %v70 = vpack.c.b16 %v68, %v67
    %v73 = vunpack.c.l.b16 %v31
    %v74 = vunpack.c.l.b16 %v32
    %v75 = vpack.c.b16 %v74, %v73
    %vm77 = vcmask 130048
    %v79 = vsel %vm77, %v69, 0
    %v82 = vsel %vm77, %v70, 0
    %84 = vmatpush.bf16.msra.mxu0 0
    %85 = vmatpush.bf16.msra.mxu0 0
    %86 = vmatpush.bf16.msra.mxu0 0
    %87 = vmatpush.bf16.msra.mxu0 0
    %88 = vmatpush.bf16.msra.mxu0 0
    %89 = vmatpush.bf16.msra.mxu0 0
    %90 = vmatpush.bf16.msra.mxu0 0
    %91 = vmatpush.bf16.msra.mxu0 %v75
    %92 = vmatmul.bf16.gmra.mxu0 %v79
    %v93 = vpop.f32.mrf.mxu0
    %v94 = vadd.f32 %v44, %v93
    %v95 = vpop.f32.mrf.mxu0
    %v96 = vadd.f32 %v49, %v95
    %97 = vmatmul.bf16.gmra.mxu0 %v82
    %v98 = vpop.f32.mrf.mxu0
    %v99 = vadd.f32 %v54, %v98
    %v100 = vpop.f32.mrf.mxu0
    %v101 = vadd.f32 %v59, %v100
    %102 = vdwg.mxu0
    %v103 = vtanh.pop %v94
    %v104 = vtanh.pop %v96
    %v105 = vtanh.pop %v99
    %v106 = vtanh.pop %v101
    %v107 = vld [vmem:[%s3] sm:$0xf]
    %v108 = vld [vmem:[%s3 + $0x4] sm:$0xf]
    %v109 = vld [vmem:[%s3 + $0x8] sm:$0xf]
    %v110 = vld [vmem:[%s3 + $0xc] sm:$0xf]
    %v111 = vpack.c.bf16 %v104, %v103
    %v112 = vpack.c.bf16 %v106, %v105
    %v113 = vld [vmem:[%s4] sm:$0xff]
    %v114 = vld [vmem:[%s4 + $0x8] sm:$0xff]
    %v115 = vld [vmem:[%s4 + $0x10] sm:$0xff]
    %v116 = vld [vmem:[%s4 + $0x18] sm:$0xff]
    %118 = vset.pattern.permute.xlu0 0
    %119 = vperm.xlu0 %118, %v113
    %v120 = vpop.permute.xlu0 %119
    %123 = vset.pattern.permute.xlu0 0
    %124 = vperm.xlu0 %123, %v114
    %v125 = vpop.permute.xlu0 %124
    %128 = vset.pattern.permute.xlu0 0
    %129 = vperm.xlu0 %128, %v115
    %v130 = vpop.permute.xlu0 %129
    %133 = vset.pattern.permute.xlu0 0
    %134 = vperm.xlu0 %133, %v116
    %v135 = vpop.permute.xlu0 %134
    %v141 = vunpack.c.l.b16 %v107
    %v142 = vunpack.c.l.b16 %v108
    %v143 = vunpack.c.l.b16 %v109
    %v144 = vunpack.c.l.b16 %v110
    %v145 = vpack.c.b16 %v142, %v141
    %v146 = vpack.c.b16 %v144, %v143
    %vm147 = vcmask 261120
    %v149 = vsel %vm147, %v145, 0
    %v152 = vsel %vm147, %v146, 0
    %154 = vmatpush.bf16.msra.mxu0 0
    %155 = vmatpush.bf16.msra.mxu0 0
    %156 = vmatpush.bf16.msra.mxu0 0
    %157 = vmatpush.bf16.msra.mxu0 0
    %158 = vmatpush.bf16.msra.mxu0 0
    %159 = vmatpush.bf16.msra.mxu0 0
    %160 = vmatpush.bf16.msra.mxu0 %v112
    %161 = vmatpush.bf16.msra.mxu0 %v111
    %162 = vmatmul.bf16.gmra.mxu0 %v149
    %v163 = vpop.f32.mrf.mxu0
    %v164 = vadd.f32 %v120, %v163
    %v165 = vpop.f32.mrf.mxu0
    %v166 = vadd.f32 %v125, %v165
    %167 = vmatmul.bf16.gmra.mxu0 %v152
    %v168 = vpop.f32.mrf.mxu0
    %v169 = vadd.f32 %v130, %v168
    %v170 = vpop.f32.mrf.mxu0
    %v171 = vadd.f32 %v135, %v170
    %172 = vdwg.mxu0
    %v173 = vtanh.pop %v164
    %v174 = vtanh.pop %v166
    %v175 = vtanh.pop %v169
    %v176 = vtanh.pop %v171
    %v177 = vld [vmem:[%s5] sm:$0xf]
    %v178 = vld [vmem:[%s5 + $0x4] sm:$0xf]
    %v179 = vpack.c.bf16 %v174, %v173
    %v180 = vpack.c.bf16 %v176, %v175
    %v181 = vld [vmem:[%s6] sm:$0xff]
    %v182 = vld [vmem:[%s6 + $0x8] sm:$0xff]
    %184 = vset.pattern.permute.xlu0 0
    %185 = vperm.xlu0 %184, %v181
    %v186 = vpop.permute.xlu0 %185
    %189 = vset.pattern.permute.xlu0 0
    %190 = vperm.xlu0 %189, %v182
    %v191 = vpop.permute.xlu0 %190
    %v195 = vunpack.c.l.b16 %v177
    %v196 = vunpack.c.l.b16 %v178
    %v197 = vpack.c.b16 %v196, %v195
    %v199 = vsel %vm147, %v197, 0
    %201 = vmatpush.bf16.msra.mxu0 0
    %202 = vmatpush.bf16.msra.mxu0 0
    %203 = vmatpush.bf16.msra.mxu0 0
    %204 = vmatpush.bf16.msra.mxu0 0
    %205 = vmatpush.bf16.msra.mxu0 0
    %206 = vmatpush.bf16.msra.mxu0 0
    %207 = vmatpush.bf16.msra.mxu0 %v180
    %208 = vmatpush.bf16.msra.mxu0 %v179
    %209 = vmatmul.bf16.gmra.mxu0 %v199
    %v210 = vpop.f32.mrf.mxu0
    %v211 = vadd.f32 %v186, %v210
    %v212 = vpop.f32.mrf.mxu0
    %v213 = vadd.f32 %v191, %v212
    %214 = vdwg.mxu0
    %v215 = vmax.f32 %v211, %v213
    %v216 = vrot.slane %v215, 4
    %v217 = vmax.f32 %v215, %v216
    %v218 = vrot.slane %v217, 2
    %v219 = vmax.f32 %v217, %v218
    %v220 = vrot.slane %v219, 1
    %v221 = vmax.f32 %v219, %v220
    %v222 = vsub.f32 %v211, %v221
    %v223 = vsub.f32 %v213, %v221
    %v224 = vmul.f32 %v222, 1.442695
    %v225 = vpow.pop %v224
    %v226 = vmul.f32 %v223, 1.442695
    %v227 = vpow.pop %v226
    %v228 = vadd.f32 %v225, %v227
    %v229 = vrot.slane %v228, 4
    %v230 = vadd.f32 %v228, %v229
    %v231 = vrot.slane %v230, 2
    %v232 = vadd.f32 %v230, %v231
    %v233 = vrot.slane %v232, 1
    %v234 = vadd.f32 %v232, %v233
    %v235 = vlog2.pop %v234
    %v236 = vmul.f32 %v235, 0.6931472
    %v237 = vadd.f32 %v221, %v236
    %v238 = vlaneseq
    %v239 = vshrl.u32 %v238, 7
    %v240 = vadd.s32 %v239, 8
    %v241 = vld [vmem:[%s7] sm:$0x1]
    %v242 = vperm.slane %v241, 0
    %vm243 = vcmp.eq.s32.totalorder %v239, %v242
    %vm244 = vcmp.eq.s32.totalorder %v240, %v242
    %v245 = vsel %vm243, %v211, 0.0
    %v246 = vsel %vm244, %v213, 0.0
    %v247 = vadd.f32 %v245, %v246
    %v248 = vrot.slane %v247, 4
    %v249 = vadd.f32 %v247, %v248
    %v250 = vrot.slane %v249, 2
    %v251 = vadd.f32 %v249, %v250
    %v252 = vrot.slane %v251, 1
    %v253 = vadd.f32 %v251, %v252
    %v254 = vsub.f32 %v253, %v237
    %vm255 = vcmp.eq.s32.totalorder %v239, 8
    %vm256 = vcmp.eq.s32.totalorder %v240, 8
    %v257 = vsel %vm255, %v254, %v211
    %v258 = vsel %vm256, %v254, %v213
    %259 = vst [vmem:[#allocation2] sm:$0xff] %v257
    %260 = vst [vmem:[#allocation2 + $0x8] sm:$0xff] %v258
    // Predicated region
    $region34: #{tpu_custom_call.1} parent=1 // pred_check
      _
    $region35: #{tpu_custom_call.1} parent=1 // pred_check_branch
      %262 = sbr.rel (0) target = $region37
    $region36: #{tpu_custom_call.1} parent=1 // pred_region
      %264 = vsyncadd [#allocation3], 0
      %s265 = sshll.u32 [#allocation2], 4
      %s266 = int_to_ptr.vmem [resolvable:$true] %s265
      %s267 = sshll.u32 %s8, 4
      %s268 = int_to_ptr.hbm [resolvable:$true] %s267
      %273 = dma.vmem_to_hbm [thread:$0]  %s266, 256, %s268, [#allocation3], 128, 128, 8
    $region37: #{tpu_custom_call.1} parent=1 // pred_fallthru
      _
    // Predicated region
    $region38: #{tpu_custom_call.1} parent=1 // pred_check
      _
    $region39: #{tpu_custom_call.1} parent=1 // pred_check_branch
      %275 = sbr.rel (0) target = $region41
    $region40: #{tpu_custom_call.1} parent=1 // pred_region
      %277 = dma.done [#allocation3], 256
    $region41: #{tpu_custom_call.1} parent=1 // pred_fallthru
      _
    %278 = vsyncpa [#allocation3], 1

</llo_original>
